<compile_context>
chip_gen: v7x
topology: tpu7x:2x2x1
jax: 0.10.0
libtpu: 0.0.40
codegen_flags: <defaults>
</compile_context>

<pallas_src>
import math

import jax
import jax.numpy as jnp
from jax.experimental import pallas as pl
from jax.experimental.pallas import tpu as pltpu


def _round_up(x, m):
    return ((x + m - 1) // m) * m


def patch_embed_kernel(feat_ref, w_ref, pos_ref, out_ref):
    """One grid step = one (hidden-tile, token-tile, batch) block.

    feat_ref: (TM, K)  bf16 patch vectors (row 0 of the first token tile is the
                       all-zero CLS slot, which projects to zero).
    w_ref:    (K, TN)  bf16 projection-weight slice (conv weight reshaped).
    pos_ref:  (TM, TN) bf16 position table (+ folded conv bias / cls token).
    out_ref:  (TM, TN) output tile of the (B, 1 + Np, H) embeddings.

    NOTE: every op here is row-independent along the token axis; edge token
    tiles rely on that (OOB rows hold garbage that Pallas drops on store).
    Do not add ops that mix token rows (reductions / norms) without masking.
    """
    proj = jnp.dot(feat_ref[...], w_ref[...],
                   preferred_element_type=jnp.float32)
    out_ref[...] = (proj + pos_ref[...].astype(jnp.float32)).astype(out_ref.dtype)


def build_token_features(pixel_values, patch_size, compute_dtype):
    """NCHW -> (B, 1 + Np, K) with (c, ph, pw) ordering inside each patch.

    Row 0 of the token axis is an all-zero "CLS patch" so the kernel can emit
    the CLS embedding (cls_token + pos[0]) in place.  The cast to compute_dtype
    happens *before* the transpose so the materialized intermediate is bf16
    (half the HBM traffic of an f32 path).  The constant pad is a `pad` HLO
    that fuses into the same copy fusion as the transpose.
    """
    B, C, H, W = pixel_values.shape
    P = patch_size
    nh, nw = H // P, W // P
    x = pixel_values.astype(compute_dtype)
    x = x.reshape(B, C, nh, P, nw, P)
    x = jnp.transpose(x, (0, 2, 4, 1, 3, 5))      # (B, nh, nw, C, P, P)
    x = x.reshape(B, nh * nw, C * P * P)          # (B, Np, K)
    # TODO(synk): fold this extraction into the kernel (pixel input with a
    # per-(batch, patch-row-band) BlockSpec and an in-VMEM (C,P,nw,P)->(nw,K)
    # rearrange on the XLU) to drop this HBM round trip entirely; kept
    # host-side for now because the multi-minor-dim reshape/transpose is not
    # reliably lowerable inside a Mosaic kernel.
    return jnp.pad(x, ((0, 0), (1, 0), (0, 0)))   # (B, 1 + Np, K)


def patch_embeddings_forward(pixel_values, conv_weight, conv_bias,
                             position_embeddings, cls_token, patch_size,
                             *, compute_dtype=jnp.bfloat16,
                             out_dtype=jnp.bfloat16,
                             token_tile=256, hidden_tile=1024):
    """Equivalent of PatchEmbeddings.forward (eval mode, include_cls_embed=True,
    no image mask, hidden_dropout_prob=0.0).

    pixel_values:        (B, C, H, W)  NCHW, like the PyTorch module
    conv_weight:         (hidden, C, P, P)
    conv_bias:           (hidden,)
    position_embeddings: (1, 1 + Np, hidden)  (index 0 is the CLS position)
    cls_token:           (1, 1, hidden)
    out_dtype:           dtype of the embeddings output (bf16 by default to
                         halve the store stream; pass jnp.float32 to match the
                         torch module's precision exactly).
    """
    B, C, H_img, W_img = pixel_values.shape
    hidden = conv_weight.shape[0]
    P = patch_size
    nh, nw = H_img // P, W_img // P
    Np = nh * nw
    K = C * P * P
    T = Np + 1                                    # +1 for the fused CLS row

    # ---- host-side layout glue (each fuses into a single XLA pass) ---------
    feat = build_token_features(pixel_values, P, compute_dtype)      # (B,T,K)
    w_mat = conv_weight.reshape(hidden, K).T.astype(compute_dtype)   # (K,H)
    # TODO(synk): zero-pad ragged K (e.g. 588 -> 640/768) for MXU alignment
    # once the kernel is compute-bound; it is HBM-bound today, so the extra
    # feat bytes would cost more than the MXU columns save.
    pos = position_embeddings[0].astype(jnp.float32)                 # (T,H)
    pos_ext = jnp.concatenate(
        [pos[:1] + cls_token[0].astype(jnp.float32),          # CLS: no bias
         pos[1:] + conv_bias.astype(jnp.float32)[None, :]],   # patches: +bias
        axis=0).astype(compute_dtype)                                # (T,H) bf16

    # ---- tiling -------------------------------------------------------------
    # Token tile: multiple of 8 (or the full token count); hidden tile:
    # multiple of 128 (or the full hidden dim) so output stores stay
    # lane-dense.  Tiles that do not divide T / hidden rely on Pallas masking
    # the edge block; that is safe because the kernel is row-independent.
    TM = T if T <= token_tile else token_tile
    TN = hidden if hidden <= hidden_tile else hidden_tile
    MT = pl.cdiv(T, TM)
    NT = pl.cdiv(hidden, TN)

    # v7x has 2 TensorCores per chip: with a single grid point megacore has
    # nothing to shard.  Split the hidden axis (preferred: stays lane-dense)
    # or the token axis so at least one parallel axis has extent >= 2.
    if B * MT * NT == 1:
        if hidden > 128:
            TN = _round_up(pl.cdiv(hidden, 2), 128)
        if pl.cdiv(hidden, TN) == 1 and T > 8:
            new_tm = _round_up(pl.cdiv(T, 2), 8)
            if new_tm < T:
                TM = new_tm
        MT = pl.cdiv(T, TM)
        NT = pl.cdiv(hidden, TN)

    grid_spec = pltpu.PrefetchScalarGridSpec(
        num_scalar_prefetch=0,
        # Batch innermost: weight block (0, n) and pos block (m, n) keep a
        # constant block index across the inner loop, so Pallas skips their
        # re-DMA -> weight streamed NT times and pos MT*NT times total
        # (independent of B); only the feature / output tiles stream per step.
        grid=(NT, MT, B),
        in_specs=[
            pl.BlockSpec((None, TM, K), lambda n, m, b: (b, m, 0)),  # patches
            pl.BlockSpec((K, TN), lambda n, m, b: (0, n)),           # weight
            pl.BlockSpec((TM, TN), lambda n, m, b: (m, n)),          # pos(+bias/cls)
        ],
        out_specs=pl.BlockSpec((None, TM, TN), lambda n, m, b: (b, m, n)),
    )

    embeddings = pl.pallas_call(
        patch_embed_kernel,
        out_shape=jax.ShapeDtypeStruct((B, T, hidden), out_dtype),
        grid_spec=grid_spec,
        compiler_params=pltpu.CompilerParams(
            # No reduction axis (K is untiled): every grid point is
            # independent, so all axes are parallel -- lets megacore split the
            # hidden/token axes even at batch=1.
            dimension_semantics=("parallel", "parallel", "parallel"),
            # Per-step working set (double-buffered bf16 tiles) is a few MiB
            # even at TM=256, TN=1024 -- well inside every generation's VMEM.
            vmem_limit_bytes=32 * 1024 * 1024,
        ),
    )(feat, w_mat, pos_ext)

    # hidden_dropout_prob = 0.0 and eval mode -> dropout is identity.
    # TODO(synk): image_patches_mask / mask_token blending and training-mode
    # patch_drop_rate (random_masking) paths are not implemented (defaults off).
    return embeddings


def reference_forward(pixel_values, conv_weight, conv_bias,
                      position_embeddings, cls_token, patch_size):
    """Pure-JAX f32 reference using lax conv (matches PyTorch semantics)."""
    B = pixel_values.shape[0]
    hidden = conv_weight.shape[0]
    out = jax.lax.conv_general_dilated(
        pixel_values, conv_weight,
        window_strides=(patch_size, patch_size), padding="VALID",
        dimension_numbers=("NCHW", "OIHW", "NCHW"))
    out = out + conv_bias.reshape(1, hidden, 1, 1)
    out = out.reshape(B, hidden, -1).transpose(0, 2, 1)          # (B, Np, H)
    out = out + position_embeddings[:, 1:, :]
    cls = cls_token + position_embeddings[:, :1, :]
    cls = jnp.broadcast_to(cls, (B, 1, hidden))
    return jnp.concatenate([cls, out], axis=1)


def reference_forward_quantized(pixel_values, conv_weight, conv_bias,
                                position_embeddings, cls_token, patch_size):
    """f32 reference on the same bf16-rounded operands the kernel sees
    (bf16 pixels / weight / fused pos table, f32 accumulation)."""
    B = pixel_values.shape[0]
    hidden = conv_weight.shape[0]
    px_q = pixel_values.astype(jnp.bfloat16).astype(jnp.float32)
    w_q = conv_weight.astype(jnp.bfloat16).astype(jnp.float32)
    proj = jax.lax.conv_general_dilated(
        px_q, w_q, window_strides=(patch_size, patch_size), padding="VALID",
        dimension_numbers=("NCHW", "OIHW", "NCHW"))
    proj = proj.reshape(B, hidden, -1).transpose(0, 2, 1)        # (B, Np, H)
    pos = position_embeddings[0].astype(jnp.float32)
    patch_add = (pos[1:] + conv_bias[None, :]).astype(jnp.bfloat16).astype(jnp.float32)
    cls_row = (pos[:1] + cls_token[0]).astype(jnp.bfloat16).astype(jnp.float32)
    out = proj + patch_add[None]
    cls_b = jnp.broadcast_to(cls_row[None], (B, 1, hidden))
    return jnp.concatenate([cls_b, out], axis=1)


def _run_case(name, *, B, C, H_img, W_img, P, hidden, key, **tile_kwargs):
    nh, nw = H_img // P, W_img // P
    Np = nh * nw
    K = C * P * P

    k_x, k_w, k_b, k_pos, k_cls = jax.random.split(key, 5)
    pixel_values = jax.random.normal(k_x, (B, C, H_img, W_img), jnp.float32)

    # Deterministic synthetic params (shapes from __init__).  PyTorch inits
    # bias / pos / cls to zeros; random values exercise the folded adds.
    std = math.sqrt(1.0 / K)
    conv_weight = std * jax.random.truncated_normal(
        k_w, -2.0, 2.0, (hidden, C, P, P), dtype=jnp.float32)
    conv_bias = 0.1 * jax.random.normal(k_b, (hidden,), dtype=jnp.float32)
    position_embeddings = 0.02 * jax.random.normal(
        k_pos, (1, 1 + Np, hidden), dtype=jnp.float32)
    cls_token = 0.02 * jax.random.normal(k_cls, (1, 1, hidden), dtype=jnp.float32)

    out = patch_embeddings_forward(pixel_values, conv_weight, conv_bias,
                                   position_embeddings, cls_token, P,
                                   **tile_kwargs)
    out = jax.block_until_ready(out)
    assert out.shape == (B, 1 + Np, hidden), (name, out.shape)
    assert out.dtype == jnp.bfloat16, (name, out.dtype)
    out_f32 = out.astype(jnp.float32)

    # Tight-ish check: reproduce the kernel's quantization (bf16 pixels /
    # weight / pos table, f32 accumulation) with an independent lax-conv
    # extraction path.  Remaining error = accumulation order + the final bf16
    # store (~1 ulp of bf16 at |value| ~ 4).
    ref_q = reference_forward_quantized(pixel_values, conv_weight, conv_bias,
                                        position_embeddings, cls_token, P)
    err_q = float(jnp.max(jnp.abs(out_f32 - ref_q)))
    assert err_q < 8e-2, (name, err_q)

    # Loose check vs. the full-f32 reference (adds bf16 input-rounding error).
    ref = reference_forward(pixel_values, conv_weight, conv_bias,
                            position_embeddings, cls_token, P)
    assert jnp.allclose(out_f32, ref, atol=1e-1, rtol=5e-2), \
        (name, float(jnp.max(jnp.abs(out_f32 - ref))))


if __name__ == "__main__":
    key = jax.random.PRNGKey(0)
    k1, k2, k3 = jax.random.split(key, 3)

    # Case 1: small shapes consistent with the module (single tile on both
    # axes, hidden lane-dense at 128).
    _run_case("small", B=2, C=4, H_img=16, W_img=16, P=4, hidden=128, key=k1)

    # Case 2: multi-tile token axis with a ragged edge tile (T = 273 -> three
    # 128-row token tiles, last one masked) and two hidden tiles, with the CLS
    # row fused into the first token tile.
    _run_case("tiled", B=2, C=3, H_img=64, W_img=68, P=4, hidden=256, key=k2,
              token_tile=128, hidden_tile=128)

    # Case 3: batch=1, everything fits a single natural tile -> exercises the
    # degenerate-grid guard (hidden axis is split so both v7x TCs get work).
    _run_case("single", B=1, C=3, H_img=32, W_img=32, P=4, hidden=256, key=k3)

    print("KERNEL_OK")
</pallas_src>

<mosaic_0001>
module attributes {stable_mosaic.version = 11 : i64} {
  func.func @patch_embed_kernel(%arg0: i32, %arg1: i32, %arg2: i32, %arg3: memref<1x17x64xbf16, #tpu.memory_space<vmem>>, %arg4: memref<64x128xbf16, #tpu.memory_space<vmem>>, %arg5: memref<17x128xbf16, #tpu.memory_space<vmem>>, %arg6: memref<1x17x128xbf16, #tpu.memory_space<vmem>>) attributes {dimension_semantics = [#tpu.dimension_semantics<parallel>, #tpu.dimension_semantics<parallel>, #tpu.dimension_semantics<parallel>], iteration_bounds = array<i64: 1, 1, 2>, scalar_prefetch = 0 : i64, scratch_operands = 0 : i64, tpu.core_type = #tpu.core_type<tc>, window_params = [{transform_indices = @transform_0, window_bounds = array<i64: 1, 17, 64>}, {transform_indices = @transform_1, window_bounds = array<i64: 64, 128>}, {transform_indices = @transform_2, window_bounds = array<i64: 17, 128>}, {transform_indices = @transform_3, window_bounds = array<i64: 1, 17, 128>}]} {
    %c0 = arith.constant 0 : index
    %c0_0 = arith.constant 0 : index
    %c0_1 = arith.constant 0 : index
    %0 = vector.load %arg3[%c0, %c0_0, %c0_1] : memref<1x17x64xbf16, #tpu.memory_space<vmem>>, vector<1x17x64xbf16>
    %1 = vector.shape_cast %0 : vector<1x17x64xbf16> to vector<17x64xbf16>
    %c0_2 = arith.constant 0 : index
    %c0_3 = arith.constant 0 : index
    %2 = vector.load %arg4[%c0_2, %c0_3] : memref<64x128xbf16, #tpu.memory_space<vmem>>, vector<64x128xbf16>
    %cst = arith.constant dense<0.000000e+00> : vector<17x128xf32>
    %3 = tpu.matmul %1, %2, %cst {dimension_numbers = #tpu.dot_dimension_numbers<[1], [0], [0], [1], [0, 0, 1, 1], [], []>} : vector<17x64xbf16>, vector<64x128xbf16>, vector<17x128xf32> -> vector<17x128xf32>
    %c0_4 = arith.constant 0 : index
    %c0_5 = arith.constant 0 : index
    %4 = vector.load %arg5[%c0_4, %c0_5] : memref<17x128xbf16, #tpu.memory_space<vmem>>, vector<17x128xbf16>
    %5 = arith.extf %4 : vector<17x128xbf16> to vector<17x128xf32>
    %6 = arith.addf %3, %5 : vector<17x128xf32>
    %7 = arith.truncf %6 : vector<17x128xf32> to vector<17x128xbf16>
    %c0_6 = arith.constant 0 : index
    %c0_7 = arith.constant 0 : index
    %c0_8 = arith.constant 0 : index
    %8 = vector.load %arg6[%c0_6, %c0_7, %c0_8] : memref<1x17x128xbf16, #tpu.memory_space<vmem>>, vector<1x17x128xbf16>
    %9 = vector.shape_cast %8 : vector<1x17x128xbf16> to vector<17x128xbf16>
    %10 = vector.shape_cast %7 : vector<17x128xbf16> to vector<1x17x128xbf16>
    tpu.vector_store %arg6[%c0_6, %c0_7, %c0_8], %10 {strides = array<i32>} : memref<1x17x128xbf16, #tpu.memory_space<vmem>>, vector<1x17x128xbf16>,
    return
  }
  func.func @transform_0(%arg0: i32, %arg1: i32, %arg2: i32) -> (i32, i32, i32) {
    %c0_i32 = arith.constant 0 : i32
    %c0_i32_0 = arith.constant 0 : i32
    return %arg2, %arg1, %c0_i32 : i32, i32, i32
  }
  func.func @transform_1(%arg0: i32, %arg1: i32, %arg2: i32) -> (i32, i32) {
    %c0_i32 = arith.constant 0 : i32
    %c0_i32_0 = arith.constant 0 : i32
    return %c0_i32, %arg0 : i32, i32
  }
  func.func @transform_2(%arg0: i32, %arg1: i32, %arg2: i32) -> (i32, i32) {
    %c0_i32 = arith.constant 0 : i32
    return %arg1, %arg0 : i32, i32
  }
  func.func @transform_3(%arg0: i32, %arg1: i32, %arg2: i32) -> (i32, i32, i32) {
    %c0_i32 = arith.constant 0 : i32
    return %arg2, %arg1, %arg0 : i32, i32, i32
  }
}

</mosaic_0001>

<llo_original>
// kernel: tpu_custom_call.1
$region0: #{tpu_custom_call.1}
  #allocation0 [shape = 'u32[]', space=smem, size = 0x4, offset = 0x4, fixed_abs, tag = 'smem constant byte address 0x4 - core index']
  #allocation1 [shape = 'u32[144,128]{1,0:T(1,128)}', space=vmem, size = 0x12000, scoped, tag = 'internal scratch']
  %s0 = inlined_call_operand.vmem [shape: bf16[2,17,64], index: 0, kind: input, shape index: {}]
  %s1 = inlined_call_operand.vmem [shape: bf16[64,128], index: 1, kind: input, shape index: {}]
  %s2 = inlined_call_operand.vmem [shape: bf16[17,128], index: 2, kind: input, shape index: {}]
  %s3 = inlined_call_operand.vmem [shape: bf16[2,17,128], index: 3, kind: output, shape index: {}]
  %s4 = sld [smem:[#allocation0]]
  $region45: #{tpu_custom_call.1} parent=0
    _
  %s6 = ssub.s32 1, %s4
  %s7 = scalar_select 0, %s6, %s4
  loop: start=0, step=1, limit=4
  $region2: #{tpu_custom_call.1} parent=0 // loop_pre_header
    _
  $region3: #{tpu_custom_call.1} parent=0 // loop_header
    %s9 = sphi 0, %s13
    %p10 = scmp.ge.s32.totalorder %s9, 4
    %s16 = sphi 0, %s35
    %s17 = sphi 0, %s31
    %s18 = sphi 0, %s27
    %s19 = sphi 0, %s16
    %s20 = sphi 0, %s17
    %s21 = sphi 0, %s18
    %s22 = sphi 0, %s19
    %s23 = sphi 0, %s20
    %s24 = sphi 0, %s21
    %s40 = sphi 0, %s42
    %s43 = sphi 0, %s40
    %s44 = sphi 0, %s43
    %s60 = sphi 0, %s44
    %s66 = sphi 0, %s68
    %s69 = sphi 0, %s66
    %s70 = sphi 0, %s69
    %s86 = sphi 0, %s70
    %s94 = sphi 0, %s96
    %s97 = sphi 0, %s94
    %s98 = sphi 0, %s97
    %s114 = sphi 0, %s98
    %s124 = sphi 0, %s126
    %s127 = sphi 0, %s124
    %s128 = sphi 0, %s127
    %s144 = sphi 0, %s128
  $region4: #{tpu_custom_call.1} parent=0 // loop_header_branch
    %12 = sbr.rel (%p10) target = $region8
  $region5: #{tpu_custom_call.1} parent=0 // loop_body
    %s14 = ssub.s32 %s9, 1
    %s15 = ssub.s32 %s9, 2
    %s25 = sadd.s32 1, %s18
    %p26 = scmp.ge.s32.totalorder %s25, 2
    %s27 = scalar_select %p26, 0, %s25
    %s28 = sadd.s32 1, %s17
    %s29 = scalar_select %p26, %s28, %s17
    %p30 = scmp.ge.s32.totalorder %s29, 1
    %s31 = scalar_select %p30, 0, %s29
    %s32 = sadd.s32 1, %s16
    %s33 = scalar_select %p30, %s32, %s16
    %p34 = scmp.ge.s32.totalorder %s33, 1
    %s35 = scalar_select %p34, 0, %s33
    %s36 = ssub.s32 %s18, %s27
    %s37 = ssub.s32 %s17, %s31
    %s38 = sor.u32 %s36, %s37
    %p39 = scmp.eq.s32.totalorder %s38, 0
    %s41 = sadd.s32 %s40, 1
    %s42 = scalar_select %p39, %s40, %s41
    %p45 = pneg %p39
    %p46 = scmp.eq.s32.totalorder %s9, 1
    %p47 = por %p45, %p46
    %p48 = scmp.ne.s32.totalorder %s40, %s43
    %p49 = scmp.eq.s32.totalorder %s9, 0
    %p50 = por %p48, %p49
    %p51 = scmp.ne.s32.totalorder %s40, %s43
    %p52 = scmp.eq.s32.totalorder %s14, 1
    %p53 = por %p51, %p52
    %p54 = scmp.ne.s32.totalorder %s43, %s44
    %p55 = scmp.eq.s32.totalorder %s14, 0
    %p56 = por %p54, %p55
    %p57 = scmp.ne.s32.totalorder %s43, %s44
    %p58 = scmp.eq.s32.totalorder %s15, 1
    %p59 = por %p57, %p58
    %p61 = scmp.ne.s32.totalorder %s44, %s60
    %p62 = scmp.eq.s32.totalorder %s15, 0
    %p63 = por %p61, %p62
    %s64 = ssub.s32 %s16, %s35
    %p65 = scmp.eq.s32.totalorder %s64, 0
    %s67 = sadd.s32 %s66, 1
    %s68 = scalar_select %p65, %s66, %s67
    %p71 = pneg %p65
    %p72 = scmp.eq.s32.totalorder %s9, 1
    %p73 = por %p71, %p72
    %p74 = scmp.ne.s32.totalorder %s66, %s69
    %p75 = scmp.eq.s32.totalorder %s9, 0
    %p76 = por %p74, %p75
    %p77 = scmp.ne.s32.totalorder %s66, %s69
    %p78 = scmp.eq.s32.totalorder %s14, 1
    %p79 = por %p77, %p78
    %p80 = scmp.ne.s32.totalorder %s69, %s70
    %p81 = scmp.eq.s32.totalorder %s14, 0
    %p82 = por %p80, %p81
    %p83 = scmp.ne.s32.totalorder %s69, %s70
    %p84 = scmp.eq.s32.totalorder %s15, 1
    %p85 = por %p83, %p84
    %p87 = scmp.ne.s32.totalorder %s70, %s86
    %p88 = scmp.eq.s32.totalorder %s15, 0
    %p89 = por %p87, %p88
    %s90 = ssub.s32 %s17, %s31
    %s91 = ssub.s32 %s16, %s35
    %s92 = sor.u32 %s90, %s91
    %p93 = scmp.eq.s32.totalorder %s92, 0
    %s95 = sadd.s32 %s94, 1
    %s96 = scalar_select %p93, %s94, %s95
    %p99 = pneg %p93
    %p100 = scmp.eq.s32.totalorder %s9, 1
    %p101 = por %p99, %p100
    %p102 = scmp.ne.s32.totalorder %s94, %s97
    %p103 = scmp.eq.s32.totalorder %s9, 0
    %p104 = por %p102, %p103
    %p105 = scmp.ne.s32.totalorder %s94, %s97
    %p106 = scmp.eq.s32.totalorder %s14, 1
    %p107 = por %p105, %p106
    %p108 = scmp.ne.s32.totalorder %s97, %s98
    %p109 = scmp.eq.s32.totalorder %s14, 0
    %p110 = por %p108, %p109
    %p111 = scmp.ne.s32.totalorder %s97, %s98
    %p112 = scmp.eq.s32.totalorder %s15, 1
    %p113 = por %p111, %p112
    %p115 = scmp.ne.s32.totalorder %s98, %s114
    %p116 = scmp.eq.s32.totalorder %s15, 0
    %p117 = por %p115, %p116
    %s118 = ssub.s32 %s18, %s27
    %s119 = ssub.s32 %s17, %s31
    %s120 = sor.u32 %s118, %s119
    %s121 = ssub.s32 %s16, %s35
    %s122 = sor.u32 %s120, %s121
    %p123 = scmp.eq.s32.totalorder %s122, 0
    %s125 = sadd.s32 %s124, 1
    %s126 = scalar_select %p123, %s124, %s125
    %p129 = pneg %p123
    %p130 = scmp.eq.s32.totalorder %s9, 1
    %p131 = por %p129, %p130
    %p132 = scmp.ne.s32.totalorder %s124, %s127
    %p133 = scmp.eq.s32.totalorder %s9, 0
    %p134 = por %p132, %p133
    %p135 = scmp.ne.s32.totalorder %s124, %s127
    %p136 = scmp.eq.s32.totalorder %s14, 1
    %p137 = por %p135, %p136
    %p138 = scmp.ne.s32.totalorder %s127, %s128
    %p139 = scmp.eq.s32.totalorder %s14, 0
    %p140 = por %p138, %p139
    %p141 = scmp.ne.s32.totalorder %s127, %s128
    %p142 = scmp.eq.s32.totalorder %s15, 1
    %p143 = por %p141, %p142
    %p145 = scmp.ne.s32.totalorder %s128, %s144
    %p146 = scmp.eq.s32.totalorder %s15, 0
    %p147 = por %p145, %p146
    %p148 = scmp.le.s32.totalorder 1, %s9
    %p149 = scmp.lt.s32.totalorder %s9, 3
    %p150 = pnand %p148, %p149
    %p151 = pneg %p150
    // Predicated region
    $region9: #{tpu_custom_call.1} parent=5 // pred_check
      _
    $region10: #{tpu_custom_call.1} parent=5 // pred_check_branch
      %153 = sbr.rel (%p150) target = $region12
    $region11: #{tpu_custom_call.1} parent=5 // pred_region
      %s154 = ssub.s32 %s9, 1
      // Predicated region
      $region13: #{tpu_custom_call.1} parent=11 // pred_check
        %p155 = pneg %p82
      $region14: #{tpu_custom_call.1} parent=11 // pred_check_branch
        %157 = sbr.rel (%p155) target = $region16
      $region15: #{tpu_custom_call.1} parent=11 // pred_region
        %p158 = scmp.lt.s32.totalorder %s19, 0
        %s159 = scalar_select %p158, %s19, 0
        %s160 = smul.addr %s159, 4
        %s161 = scalar_lea.vmem %s1, %s160
      $region16: #{tpu_custom_call.1} parent=11 // pred_fallthru
        _
      // Predicated region
      $region17: #{tpu_custom_call.1} parent=11 // pred_check
        %p162 = pneg %p110
      $region18: #{tpu_custom_call.1} parent=11 // pred_check_branch
        %164 = sbr.rel (%p162) target = $region20
      $region19: #{tpu_custom_call.1} parent=11 // pred_region
        %s165 = smul.u32 3, %s20
        %p166 = scmp.lt.s32.totalorder %s165, 2
        %s167 = scalar_select %p166, %s165, 2
        %p168 = scmp.lt.s32.totalorder %s19, 0
        %s169 = scalar_select %p168, %s19, 0
        %s170 = sadd.s32 %s169, %s167
        %s171 = smul.addr %s170, 4
        %s172 = scalar_lea.vmem %s2, %s171
        %s173 = smul.u32 3, %s20
      $region20: #{tpu_custom_call.1} parent=11 // pred_fallthru
        _
    $region12: #{tpu_custom_call.1} parent=5 // pred_fallthru
      _
    %p174 = scmp.lt.s32.totalorder %s9, 2
    // Predicated region
    $region21: #{tpu_custom_call.1} parent=5 // pred_check
      %p175 = pneg %p174
    $region22: #{tpu_custom_call.1} parent=5 // pred_check_branch
      %177 = sbr.rel (%p175) target = $region24
    $region23: #{tpu_custom_call.1} parent=5 // pred_region
      // Predicated region
      $region25: #{tpu_custom_call.1} parent=23 // pred_check
        %p178 = pneg %p50
      $region26: #{tpu_custom_call.1} parent=23 // pred_check_branch
        %180 = sbr.rel (%p178) target = $region28
      $region27: #{tpu_custom_call.1} parent=23 // pred_region
        %s181 = smul.u32 3, %s17
        %p182 = scmp.lt.s32.totalorder %s18, 1
        %s183 = scalar_select %p182, %s18, 1
        %p184 = scmp.lt.s32.totalorder %s181, 2
        %s185 = scalar_select %p184, %s181, 2
        %s186 = smul.addr %s183, 3
        %s187 = sadd.s32 %s185, %s186
        %s188 = smul.addr %s187, 4
        %s189 = scalar_lea.vmem %s0, %s188
        %s190 = smul.u32 3, %s17
      $region28: #{tpu_custom_call.1} parent=23 // pred_fallthru
        _
    $region24: #{tpu_custom_call.1} parent=5 // pred_fallthru
      _
    %p191 = scmp.le.s32.totalorder 1, %s9
    %p192 = scmp.lt.s32.totalorder %s9, 3
    %p193 = pnand %p191, %p192
    %p194 = pneg %p193
    // Predicated region
    $region29: #{tpu_custom_call.1} parent=5 // pred_check
      _
    $region30: #{tpu_custom_call.1} parent=5 // pred_check_branch
      %196 = sbr.rel (%p193) target = $region32
    $region31: #{tpu_custom_call.1} parent=5 // pred_region
      %s197 = ssub.s32 %s9, 1
      %s198 = smul.u32 3, %s20
      %p199 = scmp.lt.s32.totalorder %s21, 1
      %s200 = scalar_select %p199, %s21, 1
      %p201 = scmp.lt.s32.totalorder %s198, 2
      %s202 = scalar_select %p201, %s198, 2
      %s203 = smul.addr %s200, 3
      %s204 = sadd.s32 %s202, %s203
      %s205 = smul.addr %s204, 4
      %s206 = scalar_lea.vmem %s0, %s205
      %p207 = pneg %p56
      %p208 = pneg %p53
      %p209 = scmp.lt.s32.totalorder %s19, 0
      %s210 = scalar_select %p209, %s19, 0
      %s211 = smul.addr %s210, 4
      %s212 = scalar_lea.vmem %s1, %s211
      %p213 = pneg %p82
      %p214 = pneg %p79
      %s215 = smul.u32 3, %s20
      %p216 = scmp.lt.s32.totalorder %s215, 2
      %s217 = scalar_select %p216, %s215, 2
      %p218 = scmp.lt.s32.totalorder %s19, 0
      %s219 = scalar_select %p218, %s19, 0
      %s220 = sadd.s32 %s219, %s217
      %s221 = smul.addr %s220, 4
      %s222 = scalar_lea.vmem %s2, %s221
      %p223 = pneg %p110
      %p224 = pneg %p107
      %p225 = pneg %p140
      %p226 = pneg %p137
      %s227 = smul.u32 3, %s20
      %p228 = scmp.lt.s32.totalorder %s21, 1
      %s229 = scalar_select %p228, %s21, 1
      %p230 = scmp.lt.s32.totalorder %s227, 2
      %s231 = scalar_select %p230, %s227, 2
      %p232 = scmp.lt.s32.totalorder %s19, 0
      %s233 = scalar_select %p232, %s19, 0
      %s234 = sadd.s32 %s233, %s231
      %s235 = smul.addr %s229, 3
      %s236 = sadd.s32 %s234, %s235
      %s237 = smul.addr %s236, 4
      %s238 = scalar_lea.vmem %s3, %s237
      %s239 = smul.u32 3, %s20
      %p240 = scmp.lt.s32.totalorder %s21, 1
      %s241 = scalar_select %p240, %s21, 1
      %p242 = scmp.lt.s32.totalorder %s239, 2
      %s243 = scalar_select %p242, %s239, 2
      %s244 = smul.addr %s241, 3
      %s245 = sadd.s32 %s243, %s244
      %s246 = smul.addr %s245, 4
      %s247 = scalar_lea.vmem %s0, %s246
      %s248 = smul.u32 3, %s20
      %p249 = scmp.lt.s32.totalorder %s19, 0
      %s250 = scalar_select %p249, %s19, 0
      %s251 = smul.addr %s250, 4
      %s252 = scalar_lea.vmem %s1, %s251
      %s253 = smul.u32 3, %s20
      %p254 = scmp.lt.s32.totalorder %s253, 2
      %s255 = scalar_select %p254, %s253, 2
      %p256 = scmp.lt.s32.totalorder %s19, 0
      %s257 = scalar_select %p256, %s19, 0
      %s258 = sadd.s32 %s257, %s255
      %s259 = smul.addr %s258, 4
      %s260 = scalar_lea.vmem %s2, %s259
      %s261 = smul.u32 3, %s20
      %s262 = smul.u32 3, %s20
      %p263 = scmp.lt.s32.totalorder %s21, 1
      %s264 = scalar_select %p263, %s21, 1
      %p265 = scmp.lt.s32.totalorder %s262, 2
      %s266 = scalar_select %p265, %s262, 2
      %p267 = scmp.lt.s32.totalorder %s19, 0
      %s268 = scalar_select %p267, %s19, 0
      %s269 = sadd.s32 %s268, %s266
      %s270 = smul.addr %s264, 3
      %s271 = sadd.s32 %s269, %s270
      %s272 = smul.addr %s271, 4
      %s273 = scalar_lea.vmem %s3, %s272
      %s274 = smul.u32 3, %s20
      %v276 = vld [vmem:[%s247] sm:$0xf]
      %v277 = vld [vmem:[%s247 + $0x4] sm:$0xf]
      %v278 = vld [vmem:[%s247 + $0x8] sm:$0x1]
      %v279 = vld [vmem:[%s252] sm:$0xf]
      %v280 = vld [vmem:[%s252 + $0x4] sm:$0xf]
      %v281 = vld [vmem:[%s252 + $0x8] sm:$0xf]
      %v282 = vld [vmem:[%s252 + $0xc] sm:$0xf]
      %v283 = vld [vmem:[%s252 + $0x10] sm:$0xf]
      %v284 = vld [vmem:[%s252 + $0x14] sm:$0xf]
      %v285 = vld [vmem:[%s252 + $0x18] sm:$0xf]
      %v286 = vld [vmem:[%s252 + $0x1c] sm:$0xf]
      %v287 = vld [vmem:[%s260] sm:$0xf]
      %v288 = vld [vmem:[%s260 + $0x4] sm:$0xf]
      %v289 = vld [vmem:[%s260 + $0x8] sm:$0x1]
      %v290 = vunpack.c.l.bf16 %v287
      %v291 = vunpack.c.l.bf16 %v288
      %v292 = vunpack.c.l.bf16 %v289
      %v296 = vunpack.c.l.b16 %v276
      %v297 = vunpack.c.l.b16 %v277
      %v298 = vunpack.c.l.b16 %v278
      %v299 = vpack.c.b16 %v297, %v296
      %v300 = vpack.c.b16 %v298, %v298
      %v309 = vunpack.c.l.b16 %v279
      %v310 = vunpack.c.l.b16 %v280
      %v311 = vunpack.c.l.b16 %v281
      %v312 = vunpack.c.l.b16 %v282
      %v313 = vunpack.c.l.b16 %v283
      %v314 = vunpack.c.l.b16 %v284
      %v315 = vunpack.c.l.b16 %v285
      %v316 = vunpack.c.l.b16 %v286
      %v317 = vpack.c.b16 %v310, %v309
      %v318 = vpack.c.b16 %v312, %v311
      %v319 = vpack.c.b16 %v314, %v313
      %v320 = vpack.c.b16 %v316, %v315
      %vm325 = vcmask 523264
      %v327 = vsel %vm325, %v299, 0
      %v330 = vsel %vm325, %v300, 0
      %332 = vmatprep.subr.bf16.mxu0 0
      %333 = vmatpush1.bf16.msra.mxu0 %v317
      %334 = vmatprep.subr.bf16.mxu0 0
      %335 = vmatpush1.bf16.msra.mxu0 %v318
      %336 = vmatprep.subr.bf16.mxu0 0
      %337 = vmatpush1.bf16.msra.mxu0 %v319
      %338 = vmatprep.subr.bf16.mxu0 0
      %339 = vmatpush1.bf16.msra.mxu0 %v320
      %340 = vmatprep.subr.bf16.mxu0 0
      %341 = vmatpush1.bf16.msra.mxu0 0
      %342 = vmatprep.subr.bf16.mxu0 0
      %343 = vmatpush1.bf16.msra.mxu0 0
      %344 = vmatprep.subr.bf16.mxu0 0
      %345 = vmatpush1.bf16.msra.mxu0 0
      %346 = vmatprep.subr.bf16.mxu0 0
      %347 = vmatpush1.bf16.msra.mxu0 0
      %348 = vmatprep.subr.bf16.mxu0 0
      %349 = vmatpush1.bf16.msra.mxu0 0
      %350 = vmatprep.subr.bf16.mxu0 0
      %351 = vmatpush1.bf16.msra.mxu0 0
      %352 = vmatprep.subr.bf16.mxu0 0
      %353 = vmatpush1.bf16.msra.mxu0 0
      %354 = vmatprep.subr.bf16.mxu0 0
      %355 = vmatpush1.bf16.msra.mxu0 0
      %356 = vmatprep.subr.bf16.mxu0 0
      %357 = vmatpush1.bf16.msra.mxu0 0
      %358 = vmatprep.subr.bf16.mxu0 0
      %359 = vmatpush1.bf16.msra.mxu0 0
      %360 = vmatprep.subr.bf16.mxu0 0
      %361 = vmatpush1.bf16.msra.mxu0 0
      %362 = vmatprep.subr.bf16.mxu0 0
      %363 = vmatpush1.bf16.msra.mxu0 0
      %364 = vmatprep.mubr.bf16.mxu0 0
      %365 = vmatmul.mubr.bf16.gmra.mrb[0].mxu0 %v327
      %v366 = vpop.f32.mrb[0].mxu0
      %v367 = vadd.f32 %v290, %v366
      %v368 = vpop.f32.mrb[0].mxu0
      %v369 = vpop.f32.mrb[0].mxu0
      %v370 = vadd.f32 %v291, %v369
      %v371 = vpop.f32.mrb[0].mxu0
      %372 = vmatprep.mubr.bf16.mxu0 0
      %373 = vmatmul.mubr.bf16.gmra.mrb[0].mxu0 %v330
      %v374 = vpop.f32.mrb[0].mxu0
      %v375 = vadd.f32 %v292, %v374
      %v376 = vpop.f32.mrb[0].mxu0
      %v377 = vpop.f32.mrb[0].mxu0
      %v378 = vpop.f32.mrb[0].mxu0
      %379 = vdwg.mxu0
      %v380 = vpack.c.bf16 %v370, %v367
      %v381 = vpack.c.bf16 %v375, %v375
      %v384 = vunpack.c.l.b16 %v380
      %v385 = vunpack.c.h.b16 %v380
      %v386 = vunpack.c.l.b16 %v381
      %v387 = vpack.c.b16 %v384, %v384
      %v388 = vpack.c.b16 %v385, %v385
      %v389 = vpack.c.b16 %v386, %v386
      %393 = vst [vmem:[%s273] sm:$0xf] %v387
      %394 = vst [vmem:[%s273 + $0x4] sm:$0xf] %v388
      %vm395 = vcmask 1040384
      %vm396 = vsmask.f32 256
      %vm397 = vmand %vm395, %vm396
      %v398 = vld [vmem:[%s273 + $0x8] sm:$0x1]
      %v399 = vsel %vm397, %v389, %v398
      %400 = vst [vmem:[%s273 + $0x8] sm:$0x1] %v399
      %s401 = smul.u32 3, %s20
      %p402 = scmp.lt.s32.totalorder %s21, 1
      %s403 = scalar_select %p402, %s21, 1
      %p404 = scmp.lt.s32.totalorder %s401, 2
      %s405 = scalar_select %p404, %s401, 2
      %p406 = scmp.lt.s32.totalorder %s19, 0
      %s407 = scalar_select %p406, %s19, 0
      %s408 = sadd.s32 %s407, %s405
      %s409 = smul.addr %s403, 3
      %s410 = sadd.s32 %s408, %s409
      %s411 = smul.addr %s410, 4
      %s412 = scalar_lea.vmem %s3, %s411
      // Predicated region
      $region33: #{tpu_custom_call.1} parent=31 // pred_check
        %p413 = pneg %p137
      $region34: #{tpu_custom_call.1} parent=31 // pred_check_branch
        %415 = sbr.rel (%p413) target = $region36
      $region35: #{tpu_custom_call.1} parent=31 // pred_region
        %s416 = smul.u32 3, %s20
      $region36: #{tpu_custom_call.1} parent=31 // pred_fallthru
        _
    $region32: #{tpu_custom_call.1} parent=5 // pred_fallthru
      _
    %p417 = scmp.le.s32.totalorder 2, %s9
    // Predicated region
    $region37: #{tpu_custom_call.1} parent=5 // pred_check
      %p418 = pneg %p417
    $region38: #{tpu_custom_call.1} parent=5 // pred_check_branch
      %420 = sbr.rel (%p418) target = $region40
    $region39: #{tpu_custom_call.1} parent=5 // pred_region
      %s421 = ssub.s32 %s9, 2
      // Predicated region
      $region41: #{tpu_custom_call.1} parent=39 // pred_check
        %p422 = pneg %p143
      $region42: #{tpu_custom_call.1} parent=39 // pred_check_branch
        %424 = sbr.rel (%p422) target = $region44
      $region43: #{tpu_custom_call.1} parent=39 // pred_region
        %s425 = smul.u32 3, %s23
        %p426 = scmp.lt.s32.totalorder %s24, 1
        %s427 = scalar_select %p426, %s24, 1
        %p428 = scmp.lt.s32.totalorder %s425, 2
        %s429 = scalar_select %p428, %s425, 2
        %p430 = scmp.lt.s32.totalorder %s22, 0
        %s431 = scalar_select %p430, %s22, 0
        %s432 = sadd.s32 %s431, %s429
        %s433 = smul.addr %s427, 3
        %s434 = sadd.s32 %s432, %s433
        %s435 = smul.addr %s434, 4
        %s436 = scalar_lea.vmem %s3, %s435
      $region44: #{tpu_custom_call.1} parent=39 // pred_fallthru
        _
    $region40: #{tpu_custom_call.1} parent=5 // pred_fallthru
      _
  $region6: #{tpu_custom_call.1} parent=0 // loop_footer
    %s13 = sadd.s32 1, %s9
  $region7: #{tpu_custom_call.1} parent=0 // loop_footer_branch
    %8 = sbr.rel target = $region3
  $region8: #{tpu_custom_call.1} parent=0 // loop_exit
    _

</llo_original>
